<compile_context>
chip_gen: v7x
topology: tpu7x:2x2x1
jax: 0.10.0
libtpu: 0.0.40
codegen_flags: <defaults>
</compile_context>

<pallas_src>
import functools
import math

import jax
import jax.numpy as jnp
from jax import lax
from jax.experimental import pallas as pl
from jax.experimental.pallas import tpu as pltpu


_DEFAULT_BLOCK_BYTES = 6 * 1024 * 1024   # per input block (Pallas double-buffers it)
_CHUNK_F32_BYTES = 128 * 1024            # bound on the live f32 upcast per accumulation step
_OUT_BLOCK_F32_BYTES = 2 * 1024 * 1024   # bound on the f32 accumulator / output block
_VMEM_LIMIT_BYTES = 32 * 1024 * 1024     # explicit: v5e default scoped VMEM is only 16 MiB


def _round_up(n, m):
    return ((n + m - 1) // m) * m


def _sublane_pack(dtype):
    # Native sublane packing: 8 rows (f32), 16 (bf16/f16), 32 (int8/fp8).
    return max(8, 32 // jnp.dtype(dtype).itemsize)


def _pick_tile(full, align, cap):
    """Tile extent along one axis: the full extent when it fits the cap (always a
    legal block dim), else the largest multiple of `align` <= cap.  Non-divisible
    tails are handled by a cdiv grid (+ in-kernel masking on the reduce axis)."""
    cap = max(align, (cap // align) * align)
    return full if full <= cap else cap


def _pick_chunk(r_tile, align, row_f32_bytes):
    """Reduce-axis rows folded per in-kernel accumulation step, bounding the live
    float32 upcast to ~_CHUNK_F32_BYTES (avoids a full-block f32 temp for bf16)."""
    max_rows = max(align, (_CHUNK_F32_BYTES // max(1, row_f32_bytes)) // align * align)
    return r_tile if r_tile <= max_rows else max_rows


# --------------------------------------------------------------------------- #
# Kernels
# --------------------------------------------------------------------------- #
def _mean_kernel_3d(x_ref, o_ref, *scratch, inv_r, r_total, r_tile, chunk, need_mask):
    # x_ref: (pre_t, r_t, post_t); o_ref: (pre_t, post_t); optional scratch: f32 acc.
    acc_ref = scratch[0] if scratch else o_ref   # f32 output -> accumulate in place
    k = pl.program_id(2)

    @pl.when(k == 0)
    def _():
        acc_ref[...] = jnp.zeros_like(acc_ref)

    pre_t, r_t, post_t = x_ref.shape

    def partial_sum(start, size):
        xv = x_ref[:, pl.ds(start, size), :].astype(jnp.float32)
        if need_mask:
            rid = lax.broadcasted_iota(jnp.int32, (pre_t, size, post_t), 1)
            xv = jnp.where(k * r_tile + start + rid < r_total, xv, 0.0)
        return jnp.sum(xv, axis=1)

    if chunk >= r_t:
        acc_ref[...] += partial_sum(0, r_t)
    else:
        n_full = r_t // chunk
        rem = r_t - n_full * chunk

        def body(c, carry):
            acc_ref[...] += partial_sum(pl.multiple_of(c * chunk, chunk), chunk)
            return carry

        lax.fori_loop(0, n_full, body, 0, unroll=(n_full <= 8))
        if rem:
            acc_ref[...] += partial_sum(n_full * chunk, rem)

    @pl.when(k == pl.num_programs(2) - 1)
    def _():
        o_ref[...] = (acc_ref[...] * inv_r).astype(o_ref.dtype)


def _mean_kernel_2d(x_ref, o_ref, *scratch, inv_r, r_total, r_tile, chunk, need_mask):
    # Last-dim reduction: x_ref: (pre_t, r_t) with R on lanes; o_ref: (pre_t, 1).
    acc_ref = scratch[0] if scratch else o_ref
    k = pl.program_id(1)

    @pl.when(k == 0)
    def _():
        acc_ref[...] = jnp.zeros_like(acc_ref)

    pre_t, r_t = x_ref.shape

    def partial_sum(start, size):
        xv = x_ref[:, pl.ds(start, size)].astype(jnp.float32)
        if need_mask:
            rid = lax.broadcasted_iota(jnp.int32, (pre_t, size), 1)
            xv = jnp.where(k * r_tile + start + rid < r_total, xv, 0.0)
        return jnp.sum(xv, axis=1, keepdims=True)

    if chunk >= r_t:
        acc_ref[...] += partial_sum(0, r_t)
    else:
        n_full = r_t // chunk
        rem = r_t - n_full * chunk

        def body(c, carry):
            acc_ref[...] += partial_sum(pl.multiple_of(c * chunk, chunk), chunk)
            return carry

        lax.fori_loop(0, n_full, body, 0, unroll=(n_full <= 8))
        if rem:
            acc_ref[...] += partial_sum(n_full * chunk, rem)

    @pl.when(k == pl.num_programs(1) - 1)
    def _():
        o_ref[...] = (acc_ref[...] * inv_r).astype(o_ref.dtype)


# --------------------------------------------------------------------------- #
# Wrappers
# --------------------------------------------------------------------------- #
def _mean_last_axis(x2, out_dtype, block_bytes):
    """Mean over the last axis of a 2-D view (pre, R): R is the lane axis."""
    pre, r = x2.shape
    itemsize = jnp.dtype(x2.dtype).itemsize
    pack = _sublane_pack(x2.dtype)
    budget_elems = max(1, block_bytes // itemsize)

    # Lane (reduce) axis first, then grow the sublane axis into the budget.
    r_tile = _pick_tile(r, 128, max(128, budget_elems // pack))
    r_pad = _round_up(r_tile, 128)
    pre_tile = _pick_tile(pre, pack, max(pack, budget_elems // max(1, r_pad)))
    # v7x megacore: give the parallel (pre) axis >= 2 blocks when possible.
    if pl.cdiv(pre, pre_tile) == 1 and pre_tile > pack:
        pre_tile = max(pack, _round_up(pre_tile // 2, pack))

    grid = (pl.cdiv(pre, pre_tile), pl.cdiv(r, r_tile))
    need_mask = (r % r_tile) != 0
    chunk = _pick_chunk(r_tile, 128, _round_up(pre_tile, 8) * 4)
    out_is_f32 = out_dtype == jnp.float32

    kernel = functools.partial(_mean_kernel_2d, inv_r=1.0 / r, r_total=r,
                               r_tile=r_tile, chunk=chunk, need_mask=need_mask)
    return pl.pallas_call(
        kernel,
        out_shape=jax.ShapeDtypeStruct((pre, 1), out_dtype),
        grid_spec=pltpu.PrefetchScalarGridSpec(
            num_scalar_prefetch=0,
            grid=grid,
            in_specs=[pl.BlockSpec((pre_tile, r_tile), lambda i, k: (i, k))],
            out_specs=pl.BlockSpec((pre_tile, 1), lambda i, k: (i, 0)),
            scratch_shapes=([] if out_is_f32
                            else [pltpu.VMEM((pre_tile, 1), jnp.float32)]),
        ),
        compiler_params=pltpu.CompilerParams(
            dimension_semantics=("parallel", "arbitrary"),
            vmem_limit_bytes=_VMEM_LIMIT_BYTES,
        ),
    )(x2)


def _mean_middle_axis(x3, out_dtype, block_bytes):
    """Mean over the middle axis of a 3-D view (pre, R, post): post is the lane axis."""
    pre, r, post = x3.shape
    itemsize = jnp.dtype(x3.dtype).itemsize
    pack = _sublane_pack(x3.dtype)
    budget_elems = max(1, block_bytes // itemsize)

    post_tile = _pick_tile(post, 128, 2048)
    post_pad = _round_up(post_tile, 128)
    pre_floor = min(pre, pack)
    r_tile = _pick_tile(r, pack, max(pack, budget_elems // max(1, pre_floor * post_pad)))
    r_pad = _round_up(r_tile, pack)
    pre_cap = min(budget_elems // max(1, r_pad * post_pad),
                  _OUT_BLOCK_F32_BYTES // max(1, post_pad * 4))
    pre_tile = _pick_tile(pre, pack, max(pack, pre_cap))

    # v7x megacore: ensure >= 2 blocks along the parallel axes when possible.
    if pl.cdiv(pre, pre_tile) * pl.cdiv(post, post_tile) == 1:
        if post_tile > 128:
            post_tile = max(128, (post_tile // 2 // 128) * 128)
        elif pre_tile > pack:
            pre_tile = max(pack, _round_up(pre_tile // 2, pack))

    grid = (pl.cdiv(pre, pre_tile), pl.cdiv(post, post_tile), pl.cdiv(r, r_tile))
    need_mask = (r % r_tile) != 0
    chunk = _pick_chunk(r_tile, pack, pre_tile * _round_up(post_tile, 128) * 4)
    out_is_f32 = out_dtype == jnp.float32

    kernel = functools.partial(_mean_kernel_3d, inv_r=1.0 / r, r_total=r,
                               r_tile=r_tile, chunk=chunk, need_mask=need_mask)
    return pl.pallas_call(
        kernel,
        out_shape=jax.ShapeDtypeStruct((pre, post), out_dtype),
        grid_spec=pltpu.PrefetchScalarGridSpec(
            num_scalar_prefetch=0,
            grid=grid,
            in_specs=[pl.BlockSpec((pre_tile, r_tile, post_tile),
                                   lambda i, j, k: (i, k, j))],
            out_specs=pl.BlockSpec((pre_tile, post_tile), lambda i, j, k: (i, j)),
            scratch_shapes=([] if out_is_f32
                            else [pltpu.VMEM((pre_tile, post_tile), jnp.float32)]),
        ),
        compiler_params=pltpu.CompilerParams(
            dimension_semantics=("parallel", "parallel", "arbitrary"),
            vmem_limit_bytes=_VMEM_LIMIT_BYTES,
        ),
    )(x3)


def pallas_mean(x, dim, *, block_bytes=_DEFAULT_BLOCK_BYTES):
    """Equivalent of torch.Tensor.mean(dim)."""
    x = jnp.asarray(x)
    if x.ndim == 0:
        raise ValueError("Mean: cannot reduce a 0-d array over a dimension.")
    if isinstance(dim, (tuple, list)):
        # Reduce highest axis first so remaining indices stay valid; an iterated
        # mean over equal-sized groups equals the joint mean.
        out = x
        for d in sorted({int(d) % x.ndim for d in dim}, reverse=True):
            out = pallas_mean(out, d, block_bytes=block_bytes)
        return out

    ndim = x.ndim
    dim = int(dim)
    if not -ndim <= dim < ndim:
        raise ValueError(f"dim={dim} out of range for ndim={ndim}")
    dim %= ndim
    if not jnp.issubdtype(x.dtype, jnp.floating):
        # Matches torch, which raises for integer/bool inputs to .mean().
        raise TypeError(f"Mean: floating dtype required, got {x.dtype}")

    out_dtype = x.dtype
    out_shape = tuple(s for i, s in enumerate(x.shape) if i != dim)

    pre = math.prod(x.shape[:dim])
    r = x.shape[dim]
    post = math.prod(x.shape[dim + 1:])

    if r == 0:
        return jnp.full(out_shape, jnp.nan, dtype=out_dtype)   # torch: NaN for empty mean
    if pre == 0 or post == 0:
        return jnp.zeros(out_shape, dtype=out_dtype)           # empty output

    if post == 1:
        out2 = _mean_last_axis(x.reshape(pre, r), out_dtype, block_bytes)
    else:
        out2 = _mean_middle_axis(x.reshape(pre, r, post), out_dtype, block_bytes)
    return out2.reshape(out_shape)


class Mean:
    """JAX/Pallas counterpart of the PyTorch `Mean` module."""

    def __init__(self, dim):
        self.dim = dim  # no parameters

    def __call__(self, x):
        return pallas_mean(x, self.dim)


if __name__ == "__main__":
    key = jax.random.PRNGKey(0)
    k0, k1, k2, k3 = jax.random.split(key, 4)

    # 1) Module-style usage: channel mean over a small NCHW activation.
    x = jax.random.normal(k0, (2, 4, 16, 16), dtype=jnp.float32)
    out = jax.block_until_ready(Mean(1)(x))
    ref = jnp.mean(x, axis=1)
    assert out.shape == ref.shape, (out.shape, ref.shape)
    assert jnp.allclose(out, ref, atol=1e-5, rtol=1e-5)

    # 2) Last-dim reduction (lane-dense input path).
    x2 = jax.random.normal(k1, (2, 3, 40), dtype=jnp.float32)
    out2 = jax.block_until_ready(Mean(-1)(x2))
    ref2 = jnp.mean(x2, axis=-1)
    assert out2.shape == ref2.shape
    assert jnp.allclose(out2, ref2, atol=1e-5, rtol=1e-5)

    # 3) Last-dim reduction forced onto several reduction steps (exercises the
    #    cdiv grid + lane-tail masking) by shrinking the per-block byte budget.
    x3 = jax.random.normal(k2, (2, 3, 200), dtype=jnp.float32)
    out3 = jax.block_until_ready(pallas_mean(x3, 2, block_bytes=4 * 1024))
    ref3 = jnp.mean(x3, axis=2)
    assert jnp.allclose(out3, ref3, atol=1e-5, rtol=1e-5)

    # 4) bf16 input with a non-divisible reduce axis split over several grid steps
    #    (exercises the f32 scratch accumulator + r-tail masking).
    x4 = jax.random.normal(k3, (4, 100, 384), dtype=jnp.bfloat16)
    out4 = jax.block_until_ready(pallas_mean(x4, 1, block_bytes=32 * 1024))
    ref4 = jnp.mean(x4.astype(jnp.float32), axis=1).astype(jnp.bfloat16)
    assert out4.shape == ref4.shape
    assert jnp.allclose(out4.astype(jnp.float32), ref4.astype(jnp.float32),
                        atol=2e-2, rtol=2e-2)

    # 5) Strip-mined in-kernel reduction (reduce tile larger than the f32 chunk bound).
    x5 = jax.random.normal(k0, (2, 256, 384), dtype=jnp.float32)
    out5 = jax.block_until_ready(pallas_mean(x5, 1))
    ref5 = jnp.mean(x5, axis=1)
    assert jnp.allclose(out5, ref5, atol=1e-5, rtol=1e-5)

    print("KERNEL_OK")
</pallas_src>

<mosaic_0001>
module attributes {stable_mosaic.version = 11 : i64} {
  func.func @_mean_kernel_3d(%arg0: i32, %arg1: i32, %arg2: i32, %arg3: memref<2x4x128xf32, #tpu.memory_space<vmem>>, %arg4: memref<2x128xf32, #tpu.memory_space<vmem>>) attributes {dimension_semantics = [#tpu.dimension_semantics<parallel>, #tpu.dimension_semantics<parallel>, #tpu.dimension_semantics<arbitrary>], iteration_bounds = array<i64: 1, 2, 1>, scalar_prefetch = 0 : i64, scratch_operands = 0 : i64, tpu.core_type = #tpu.core_type<tc>, window_params = [{transform_indices = @transform_0, window_bounds = array<i64: 2, 4, 128>}, {transform_indices = @transform_1, window_bounds = array<i64: 2, 128>}]} {
    %c0_i32 = arith.constant 0 : i32
    %0 = arith.cmpi eq, %arg2, %c0_i32 : i32
    %1 = arith.extui %0 : i1 to i32
    %c0_i32_0 = arith.constant 0 : i32
    %2 = arith.cmpi ne, %1, %c0_i32_0 : i32
    scf.if %2 {
      %cst_9 = arith.constant 0.000000e+00 : f32
      %11 = vector.broadcast %cst_9 : f32 to vector<2x128xf32>
      %c0_10 = arith.constant 0 : index
      %c0_11 = arith.constant 0 : index
      %12 = vector.load %arg4[%c0_10, %c0_11] : memref<2x128xf32, #tpu.memory_space<vmem>>, vector<2x128xf32>
      tpu.vector_store %arg4[%c0_10, %c0_11], %11 {strides = array<i32>} : memref<2x128xf32, #tpu.memory_space<vmem>>, vector<2x128xf32>,
    } else {
    }
    %c0 = arith.constant 0 : index
    %c0_1 = arith.constant 0 : index
    %3 = vector.load %arg4[%c0, %c0_1] : memref<2x128xf32, #tpu.memory_space<vmem>>, vector<2x128xf32>
    %c0_2 = arith.constant 0 : index
    %c0_3 = arith.constant 0 : index
    %c0_4 = arith.constant 0 : index
    %4 = vector.load %arg3[%c0_2, %c0_3, %c0_4] : memref<2x4x128xf32, #tpu.memory_space<vmem>>, vector<2x4x128xf32>
    %cst = arith.constant dense<0.000000e+00> : vector<2x128xf32>
    %5 = vector.multi_reduction <add>, %4, %cst [1] : vector<2x4x128xf32> to vector<2x128xf32>
    %6 = arith.addf %3, %5 : vector<2x128xf32>
    %c0_5 = arith.constant 0 : index
    %c0_6 = arith.constant 0 : index
    %7 = vector.load %arg4[%c0_5, %c0_6] : memref<2x128xf32, #tpu.memory_space<vmem>>, vector<2x128xf32>
    tpu.vector_store %arg4[%c0_5, %c0_6], %6 {strides = array<i32>} : memref<2x128xf32, #tpu.memory_space<vmem>>, vector<2x128xf32>,
    %c0_i32_7 = arith.constant 0 : i32
    %8 = arith.cmpi eq, %arg2, %c0_i32_7 : i32
    %9 = arith.extui %8 : i1 to i32
    %c0_i32_8 = arith.constant 0 : i32
    %10 = arith.cmpi ne, %9, %c0_i32_8 : i32
    scf.if %10 {
      %c0_9 = arith.constant 0 : index
      %c0_10 = arith.constant 0 : index
      %11 = vector.load %arg4[%c0_9, %c0_10] : memref<2x128xf32, #tpu.memory_space<vmem>>, vector<2x128xf32>
      %cst_11 = arith.constant 2.500000e-01 : f32
      %12 = vector.broadcast %cst_11 : f32 to vector<2x128xf32>
      %13 = arith.mulf %11, %12 : vector<2x128xf32>
      %c0_12 = arith.constant 0 : index
      %c0_13 = arith.constant 0 : index
      %14 = vector.load %arg4[%c0_12, %c0_13] : memref<2x128xf32, #tpu.memory_space<vmem>>, vector<2x128xf32>
      tpu.vector_store %arg4[%c0_12, %c0_13], %13 {strides = array<i32>} : memref<2x128xf32, #tpu.memory_space<vmem>>, vector<2x128xf32>,
    } else {
    }
    return
  }
  func.func @transform_0(%arg0: i32, %arg1: i32, %arg2: i32) -> (i32, i32, i32) {
    %c0_i32 = arith.constant 0 : i32
    return %arg0, %arg2, %arg1 : i32, i32, i32
  }
  func.func @transform_1(%arg0: i32, %arg1: i32, %arg2: i32) -> (i32, i32) {
    %c0_i32 = arith.constant 0 : i32
    return %arg0, %arg1 : i32, i32
  }
}

</mosaic_0001>

<llo_original>
// kernel: tpu_custom_call.1
$region0: #{tpu_custom_call.1}
  #allocation0 [shape = 'u32[]', space=smem, size = 0x4, offset = 0x4, fixed_abs, tag = 'smem constant byte address 0x4 - core index']
  #allocation1 [shape = 'u32[144,128]{1,0:T(1,128)}', space=vmem, size = 0x12000, scoped, tag = 'internal scratch']
  %s0 = inlined_call_operand.hbm [shape: f32[2,4,256], index: 0, kind: input, shape index: {}]
  %s1 = inlined_call_operand.hbm [shape: f32[2,256], index: 1, kind: output, shape index: {}]
  %s2 = sld [smem:[#allocation0]]
  $region49: #{tpu_custom_call.1} parent=0
    _
  %s4 = ssub.s32 1, %s2
  %s5 = scalar_select 0, %s4, %s2
  $region1: #{tpu_custom_call.1} parent=0
    #allocation2 [shape = 'u8[8192]{0}', space=vmem, size = 0x2000, scoped, tag = 'input window, operand 0']
    #allocation3 [shape = 's32[2]{0}', space=sflag, size = 0x8, scoped, tag = 'scoped memory for tpu_custom_call.1']
    #allocation4 [shape = 's32[2]{0}', space=sflag, size = 0x8, scoped, tag = 'scoped memory for tpu_custom_call.1']
    #allocation5 [shape = 'u8[2048]{0}', space=vmem, size = 0x800, scoped, tag = 'output window, operand 0']
    %6 = vsyncpa [#allocation3], 0
    %s7 = scalar_lea.sflag [#allocation3], 1
    %8 = vsyncpa %s7, 0
    %9 = vsyncpa [#allocation4], 0
    %s10 = scalar_lea.sflag [#allocation4], 1
    %11 = vsyncpa %s10, 0
    loop: start=0, step=1, limit=4
    $region2: #{tpu_custom_call.1} parent=1 // loop_pre_header
      _
    $region3: #{tpu_custom_call.1} parent=1 // loop_header
      %s13 = sphi 0, %s17
      %p14 = scmp.ge.s32.totalorder %s13, 4
      %s20 = sphi 0, %s39
      %s21 = sphi 0, %s35
      %s22 = sphi 0, %s31
      %s23 = sphi 0, %s20
      %s24 = sphi 0, %s21
      %s25 = sphi 0, %s22
      %s26 = sphi 0, %s23
      %s27 = sphi 0, %s24
      %s28 = sphi 0, %s25
      %s46 = sphi 0, %s48
      %s49 = sphi 0, %s46
      %s50 = sphi 0, %s49
      %s66 = sphi 0, %s50
      %s74 = sphi 0, %s76
      %s77 = sphi 0, %s74
      %s78 = sphi 0, %s77
      %s94 = sphi 0, %s78
    $region4: #{tpu_custom_call.1} parent=1 // loop_header_branch
      %16 = sbr.rel (%p14) target = $region8
    $region5: #{tpu_custom_call.1} parent=1 // loop_body
      %s18 = ssub.s32 %s13, 1
      %s19 = ssub.s32 %s13, 2
      %s29 = sadd.s32 1, %s22
      %p30 = scmp.ge.s32.totalorder %s29, 1
      %s31 = scalar_select %p30, 0, %s29
      %s32 = sadd.s32 1, %s21
      %s33 = scalar_select %p30, %s32, %s21
      %p34 = scmp.ge.s32.totalorder %s33, 2
      %s35 = scalar_select %p34, 0, %s33
      %s36 = sadd.s32 1, %s20
      %s37 = scalar_select %p34, %s36, %s20
      %p38 = scmp.ge.s32.totalorder %s37, 1
      %s39 = scalar_select %p38, 0, %s37
      %s40 = ssub.s32 %s20, %s39
      %s41 = ssub.s32 %s22, %s31
      %s42 = sor.u32 %s40, %s41
      %s43 = ssub.s32 %s21, %s35
      %s44 = sor.u32 %s42, %s43
      %p45 = scmp.eq.s32.totalorder %s44, 0
      %s47 = sadd.s32 %s46, 1
      %s48 = scalar_select %p45, %s46, %s47
      %p51 = pneg %p45
      %p52 = scmp.eq.s32.totalorder %s13, 1
      %p53 = por %p51, %p52
      %p54 = scmp.ne.s32.totalorder %s46, %s49
      %p55 = scmp.eq.s32.totalorder %s13, 0
      %p56 = por %p54, %p55
      %p57 = scmp.ne.s32.totalorder %s46, %s49
      %p58 = scmp.eq.s32.totalorder %s18, 1
      %p59 = por %p57, %p58
      %p60 = scmp.ne.s32.totalorder %s49, %s50
      %p61 = scmp.eq.s32.totalorder %s18, 0
      %p62 = por %p60, %p61
      %p63 = scmp.ne.s32.totalorder %s49, %s50
      %p64 = scmp.eq.s32.totalorder %s19, 1
      %p65 = por %p63, %p64
      %p67 = scmp.ne.s32.totalorder %s50, %s66
      %p68 = scmp.eq.s32.totalorder %s19, 0
      %p69 = por %p67, %p68
      %s70 = ssub.s32 %s20, %s39
      %s71 = ssub.s32 %s21, %s35
      %s72 = sor.u32 %s70, %s71
      %p73 = scmp.eq.s32.totalorder %s72, 0
      %s75 = sadd.s32 %s74, 1
      %s76 = scalar_select %p73, %s74, %s75
      %p79 = pneg %p73
      %p80 = scmp.eq.s32.totalorder %s13, 1
      %p81 = por %p79, %p80
      %p82 = scmp.ne.s32.totalorder %s74, %s77
      %p83 = scmp.eq.s32.totalorder %s13, 0
      %p84 = por %p82, %p83
      %p85 = scmp.ne.s32.totalorder %s74, %s77
      %p86 = scmp.eq.s32.totalorder %s18, 1
      %p87 = por %p85, %p86
      %p88 = scmp.ne.s32.totalorder %s77, %s78
      %p89 = scmp.eq.s32.totalorder %s18, 0
      %p90 = por %p88, %p89
      %p91 = scmp.ne.s32.totalorder %s77, %s78
      %p92 = scmp.eq.s32.totalorder %s19, 1
      %p93 = por %p91, %p92
      %p95 = scmp.ne.s32.totalorder %s78, %s94
      %p96 = scmp.eq.s32.totalorder %s19, 0
      %p97 = por %p95, %p96
      %p98 = scmp.le.s32.totalorder 1, %s13
      %p99 = scmp.lt.s32.totalorder %s13, 3
      %p100 = pnand %p98, %p99
      %p101 = pneg %p100
      // Predicated region
      $region9: #{tpu_custom_call.1} parent=5 // pred_check
        _
      $region10: #{tpu_custom_call.1} parent=5 // pred_check_branch
        %103 = sbr.rel (%p100) target = $region12
      $region11: #{tpu_custom_call.1} parent=5 // pred_region
        %s104 = ssub.s32 %s13, 1
      $region12: #{tpu_custom_call.1} parent=5 // pred_fallthru
        _
      %p105 = scmp.lt.s32.totalorder %s13, 2
      // Predicated region
      $region13: #{tpu_custom_call.1} parent=5 // pred_check
        %p106 = pneg %p105
      $region14: #{tpu_custom_call.1} parent=5 // pred_check_branch
        %108 = sbr.rel (%p106) target = $region16
      $region15: #{tpu_custom_call.1} parent=5 // pred_region
        // Predicated region
        $region17: #{tpu_custom_call.1} parent=15 // pred_check
          %p109 = pneg %p56
        $region18: #{tpu_custom_call.1} parent=15 // pred_check_branch
          %111 = sbr.rel (%p109) target = $region20
        $region19: #{tpu_custom_call.1} parent=15 // pred_region
          %s112 = sand.u32 %s46, 1
          %s113 = scalar_lea.sflag [#allocation3], %s112
          %s114 = sand.u32 %s46, 1
          %s115 = smul.addr %s114, 8
          %s116 = scalar_lea.vmem [#allocation2], %s115
          %s117 = smul.u32 2, %s20
          %s119 = ssub.s32 128, 128
          %120 = vsyncadd %s113, %s119
          %s121 = smul.addr %s22, 2
          %s122 = sadd.s32 %s21, %s121
          %s123 = smul.addr %s117, 2
          %s124 = sadd.s32 %s122, %s123
          %s125 = smul.addr %s124, 64
          %s126 = scalar_lea.hbm %s0, %s125
          %s127 = sshll.u32 %s116, 4
          %s128 = int_to_ptr.vmem [resolvable:$true] %s127
          %133 = dma.hbm_to_vmem [thread:$0]  %s126, 128, %s128, %s113, 128, 64, 4
        $region20: #{tpu_custom_call.1} parent=15 // pred_fallthru
          _
      $region16: #{tpu_custom_call.1} parent=5 // pred_fallthru
        _
      %p134 = scmp.le.s32.totalorder 1, %s13
      %p135 = scmp.lt.s32.totalorder %s13, 3
      %p136 = pnand %p134, %p135
      %p137 = pneg %p136
      // Predicated region
      $region21: #{tpu_custom_call.1} parent=5 // pred_check
        _
      $region22: #{tpu_custom_call.1} parent=5 // pred_check_branch
        %139 = sbr.rel (%p136) target = $region24
      $region23: #{tpu_custom_call.1} parent=5 // pred_region
        %s140 = ssub.s32 %s13, 1
        %s141 = sand.u32 %s49, 1
        %s142 = scalar_lea.sflag [#allocation3], %s141
        %s143 = sand.u32 %s49, 1
        %s144 = smul.addr %s143, 8
        %s145 = scalar_lea.vmem [#allocation2], %s144
        // Predicated region
        $region25: #{tpu_custom_call.1} parent=23 // pred_check
          %p146 = pneg %p62
        $region26: #{tpu_custom_call.1} parent=23 // pred_check_branch
          %148 = sbr.rel (%p146) target = $region28
        $region27: #{tpu_custom_call.1} parent=23 // pred_region
          %149 = dma.done %s142, 128
        $region28: #{tpu_custom_call.1} parent=23 // pred_fallthru
          _
        %s150 = sand.u32 %s49, 1
        %s151 = scalar_lea.sflag [#allocation3], %s150
        %s152 = sand.u32 %s49, 1
        %s153 = smul.addr %s152, 8
        %s154 = scalar_lea.vmem [#allocation2], %s153
        %p155 = pneg %p62
        %p156 = pneg %p59
        %p157 = pneg %p90
        %p158 = pneg %p87
        %s159 = sand.u32 %s77, 1
        %s160 = scalar_lea.sflag [#allocation4], %s159
        %s161 = sand.u32 %s77, 1
        %s162 = smul.addr %s161, 2
        %s163 = scalar_lea.vmem [#allocation5], %s162
        %s164 = smul.u32 2, %s23
        %p165 = scmp.eq.s32.totalorder %s25, 0
        // Predicated region
        $region29: #{tpu_custom_call.1} parent=23 // pred_check
          %p166 = pneg %p165
        $region30: #{tpu_custom_call.1} parent=23 // pred_check_branch
          %168 = sbr.rel (%p166) target = $region32
        $region31: #{tpu_custom_call.1} parent=23 // pred_region
          %169 = vst [vmem:[%s163] sm:$0x3] 0.0
        $region32: #{tpu_custom_call.1} parent=23 // pred_fallthru
          _
        %v170 = vld [vmem:[%s163] sm:$0x3]
        %v171 = vld [vmem:[%s145] sm:$0xf]
        %v172 = vld [vmem:[%s145 + $0x4] sm:$0xf]
        %vm173 = vcmask 1043456
        %v174 = vsel %vm173, %v171, 0.0
        %v175 = vrot.slane %v174, 4
        %v176 = vadd.f32 %v174, %v175
        %v177 = vrot.slane %v176, 2
        %v178 = vadd.f32 %v176, %v177
        %v179 = vrot.slane %v178, 1
        %v180 = vadd.f32 %v178, %v179
        %v181 = vsel %vm173, %v172, 0.0
        %v182 = vrot.slane %v181, 4
        %v183 = vadd.f32 %v181, %v182
        %v184 = vrot.slane %v183, 2
        %v185 = vadd.f32 %v183, %v184
        %v186 = vrot.slane %v185, 1
        %v187 = vadd.f32 %v185, %v186
        %vm190 = vcmask 1041409
        %v191 = vsel %vm190, %v187, %v180
        %v193 = vadd.f32 %v170, %v191
        %194 = vst [vmem:[%s163] sm:$0x3] %v193
        // Predicated region
        $region33: #{tpu_custom_call.1} parent=23 // pred_check
          %p195 = pneg %p165
        $region34: #{tpu_custom_call.1} parent=23 // pred_check_branch
          %197 = sbr.rel (%p195) target = $region36
        $region35: #{tpu_custom_call.1} parent=23 // pred_region
          %v198 = vld [vmem:[%s163] sm:$0x3]
          %v199 = vmul.f32 %v198, 0.25
          %200 = vst [vmem:[%s163] sm:$0x3] %v199
        $region36: #{tpu_custom_call.1} parent=23 // pred_fallthru
          _
        %s201 = sand.u32 %s77, 1
        %s202 = scalar_lea.sflag [#allocation4], %s201
        %s203 = sand.u32 %s77, 1
        %s204 = smul.addr %s203, 2
        %s205 = scalar_lea.vmem [#allocation5], %s204
        // Predicated region
        $region37: #{tpu_custom_call.1} parent=23 // pred_check
          %p206 = pneg %p87
        $region38: #{tpu_custom_call.1} parent=23 // pred_check_branch
          %208 = sbr.rel (%p206) target = $region40
        $region39: #{tpu_custom_call.1} parent=23 // pred_region
          %s210 = ssub.s32 32, 32
          %211 = vsyncadd %s202, %s210
          %s212 = smul.addr %s23, 2
          %s213 = sadd.s32 %s24, %s212
          %s214 = smul.addr %s213, 32
          %s215 = scalar_lea.hbm %s1, %s214
          %s217 = sshll.u32 %s205, 4
          %s218 = int_to_ptr.vmem [resolvable:$true] %s217
          %220 = dma.vmem_to_hbm [thread:$0]  %s218, 32, %s215, %s202
        $region40: #{tpu_custom_call.1} parent=23 // pred_fallthru
          _
      $region24: #{tpu_custom_call.1} parent=5 // pred_fallthru
        _
      %p221 = scmp.le.s32.totalorder 2, %s13
      // Predicated region
      $region41: #{tpu_custom_call.1} parent=5 // pred_check
        %p222 = pneg %p221
      $region42: #{tpu_custom_call.1} parent=5 // pred_check_branch
        %224 = sbr.rel (%p222) target = $region44
      $region43: #{tpu_custom_call.1} parent=5 // pred_region
        %s225 = ssub.s32 %s13, 2
        // Predicated region
        $region45: #{tpu_custom_call.1} parent=43 // pred_check
          %p226 = pneg %p93
        $region46: #{tpu_custom_call.1} parent=43 // pred_check_branch
          %228 = sbr.rel (%p226) target = $region48
        $region47: #{tpu_custom_call.1} parent=43 // pred_region
          %s229 = sand.u32 %s78, 1
          %s230 = scalar_lea.sflag [#allocation4], %s229
          %s231 = sand.u32 %s78, 1
          %s232 = smul.addr %s231, 2
          %s233 = scalar_lea.vmem [#allocation5], %s232
          %234 = dma.done %s230, 32
        $region48: #{tpu_custom_call.1} parent=43 // pred_fallthru
          _
      $region44: #{tpu_custom_call.1} parent=5 // pred_fallthru
        _
    $region6: #{tpu_custom_call.1} parent=1 // loop_footer
      %s17 = sadd.s32 1, %s13
    $region7: #{tpu_custom_call.1} parent=1 // loop_footer_branch
      %12 = sbr.rel target = $region3
    $region8: #{tpu_custom_call.1} parent=1 // loop_exit
      _
    %235 = vsyncpa [#allocation3], 1
    %s236 = scalar_lea.sflag [#allocation3], 1
    %237 = vsyncpa %s236, 1
    %238 = vsyncpa [#allocation4], 1
    %s239 = scalar_lea.sflag [#allocation4], 1
    %240 = vsyncpa %s239, 1

</llo_original>
